<compile_context>
chip_gen: v5e
topology: v5e:2x2
jax: 0.10.0
libtpu: 0.0.40
codegen_flags: <defaults>
</compile_context>

<pallas_src>
import math
import jax
import jax.numpy as jnp
from jax.experimental import pallas as pl
from jax.experimental.pallas import tpu as pltpu


NEG_SLOPE = 0.01        # F.leaky_relu default
LANE = 128
SUBLANE_BF16 = 16       # a bf16 vreg packs 16 sublanes


def _round_up(v, m):
    return -(-v // m) * m


def _leaky_relu(x):
    return jnp.where(x > 0, x, NEG_SLOPE * x)


# ------------------------------------------------------------------------ kernel -------
def _mainnet_kernel(*refs):
    """refs = (x_ref, w0, b0, w1, b1, ..., o_ref).

    x is f32 (cast to bf16 in-kernel), weights are pre-padded bf16, biases f32.
    Accumulation, bias add and leaky_relu run in f32; inter-layer activations are bf16.
    """
    x_ref, o_ref = refs[0], refs[-1]
    wb = refs[1:-1]
    num_layers = len(wb) // 2

    h = x_ref[...].astype(jnp.bfloat16)                   # free VPU cast, no HBM pre-pass
    for li in range(num_layers):
        w_ref = wb[2 * li]
        b_ref = wb[2 * li + 1]
        acc = jnp.dot(h, w_ref[...], preferred_element_type=jnp.float32)   # MXU
        acc = _leaky_relu(acc + b_ref[...])                                 # VPU, f32
        h = acc if li == num_layers - 1 else acc.astype(jnp.bfloat16)
    o_ref[...] = h.astype(o_ref.dtype)                    # lane-dense (128-padded) store


# ------------------------------------------------------------ one-time preparation -----
def prepare_params(params):
    """Pad every layer's output dim to 128 lanes and cast weights to bf16 -- ONCE.

    Layer 0 keeps its natural input dim (the raw x is fed unpadded); deeper layers use
    the previous layer's padded width.  Zero padding is exact: padded weight columns and
    bias entries are 0, leaky_relu(0) = 0, so padded lanes stay 0 through the whole net.
    Returns (prepared_layers, out_dim).
    """
    prepared = []
    prev = params[0][0].shape[0]                          # = input_dim * 2
    for w, b in params:
        fan_in, fan_out = w.shape
        out_p = _round_up(fan_out, LANE)
        w_p = jnp.zeros((prev, out_p), jnp.bfloat16)
        w_p = w_p.at[:fan_in, :fan_out].set(w.astype(jnp.bfloat16))
        b_p = jnp.zeros((1, out_p), jnp.float32)
        b_p = b_p.at[0, :fan_out].set(b.reshape(-1).astype(jnp.float32))
        prepared.append((w_p, b_p))
        prev = out_p
    return prepared, params[-1][0].shape[1]


def _pick_tm(B):
    if B <= 128:
        return B                                          # one block (== full dim, legal)
    if B <= 2048:
        # Exactly two programs: the "parallel" batch axis shards across v7x's 2 cores,
        # tiles stay large, and 16-row alignment keeps bf16 sublanes fully packed.
        return _round_up(pl.cdiv(B, 2), SUBLANE_BF16)
    return 1024                                           # very large batches: big tiles


def _vmem_cap_bytes():
    try:
        phys = int(pltpu.get_tpu_info().vmem_capacity_bytes)
    except Exception:
        phys = 64 * 2 ** 20                               # conservative (v7x) fallback
    return (3 * phys) // 4                                # ~48 MiB v7x, ~96 MiB v5e/v6e


# ----------------------------------------------------------------------- forward -------
def mainnet_forward(x, prepared_layers, out_dim, *, tm=None, out_dtype=jnp.float32,
                    slice_output=True):
    """x: (B, 2*input_dim) float32.  prepared_layers: output of prepare_params()."""
    B, in_feat = x.shape
    widths = [w.shape[1] for w, _ in prepared_layers]     # padded per-layer output widths
    out_p = widths[-1]

    if tm is None:
        tm = _pick_tm(B)
    grid = (pl.cdiv(B, tm),)

    cap = _vmem_cap_bytes()
    weight_bytes = sum(int(w.size) * w.dtype.itemsize + int(b.size) * b.dtype.itemsize
                       for w, b in prepared_layers)
    # Constant index maps -> weights are grid-resident; single-buffer them only when the
    # double-buffered copy would eat a large chunk of VMEM (big hidden dims).
    single_buffer_weights = (2 * weight_bytes) > (cap // 3)
    # TODO(synk): for hidden dims large enough that even single-buffered weights overflow
    # the VMEM cap, fall back to a per-layer / K-tiled grid instead of this fused kernel.

    def _resident_spec(shape):
        if single_buffer_weights:
            return pl.BlockSpec(shape, lambda i: (0, 0), pipeline_mode=pl.Buffered(1))
        return pl.BlockSpec(shape, lambda i: (0, 0))

    flat_args = [x]
    in_specs = [pl.BlockSpec((tm, in_feat), lambda i: (i, 0))]   # last dim == full dim
    for w_p, b_p in prepared_layers:
        flat_args += [w_p, b_p]
        in_specs += [_resident_spec(w_p.shape), _resident_spec(b_p.shape)]

    # Explicit VMEM budget, clamped to a generation-aware cap.
    out_isize = jnp.dtype(out_dtype).itemsize
    wbuf = 1 if single_buffer_weights else 2
    vmem_bytes = (2 * tm * in_feat * 4                    # double-buffered x tiles (f32)
                  + 2 * tm * out_p * out_isize            # double-buffered out tiles
                  + wbuf * weight_bytes                   # resident weights + biases
                  + tm * max(widths) * (4 + 2))           # live f32 acc + bf16 h
    vmem_limit = int(min(cap, max(16 * 2 ** 20, 2 * vmem_bytes)))

    # Cost hint for the XLA scheduler.
    flops = 2 * B * sum(k * n for k, n in zip([in_feat] + widths[:-1], widths))
    bytes_accessed = int(x.size) * 4 + weight_bytes + B * out_p * out_isize

    out_padded = pl.pallas_call(
        _mainnet_kernel,
        out_shape=jax.ShapeDtypeStruct((B, out_p), out_dtype),
        grid_spec=pltpu.PrefetchScalarGridSpec(
            num_scalar_prefetch=0,
            grid=grid,
            in_specs=in_specs,
            out_specs=pl.BlockSpec((tm, out_p), lambda i: (i, 0)),
        ),
        compiler_params=pltpu.CompilerParams(
            dimension_semantics=("parallel",),
            vmem_limit_bytes=vmem_limit,
        ),
        cost_estimate=pl.CostEstimate(
            flops=flops, transcendentals=0, bytes_accessed=bytes_accessed),
    )(*flat_args)

    if not slice_output:
        return out_padded              # padded slab: let the consumer slice/fuse lazily
    return out_padded[:, :out_dim]


# ---------------------------------------------------------------- params & references --
def init_params(key, input_dim, output_dim, hidden_dim=128, num_layers=4):
    """Xavier-uniform weights stored as (in, out), zero biases — matches
    nn.init.xavier_uniform_ / constant_(bias, 0) in MainNet.__init__."""
    if num_layers == 1:
        layer_dims = [(input_dim * 2, output_dim)]
    else:
        layer_dims = [(input_dim * 2, hidden_dim)]
        layer_dims += [(hidden_dim, hidden_dim)] * (num_layers - 2)
        layer_dims += [(hidden_dim, output_dim)]
    params = []
    for fan_in, fan_out in layer_dims:
        key, sub = jax.random.split(key)
        bound = math.sqrt(6.0 / (fan_in + fan_out))
        w = jax.random.uniform(sub, (fan_in, fan_out), jnp.float32,
                               minval=-bound, maxval=bound)
        b = jnp.zeros((fan_out,), jnp.float32)
        params.append((w, b))
    return params


def mainnet_ref_f32(x, params):
    """Pure-f32 reference matching the PyTorch forward."""
    h = x
    for w, b in params:
        h = h @ w + b
        h = jnp.where(h > 0, h, NEG_SLOPE * h)
    return h


def mainnet_ref_bf16(x, params):
    """Reference with the same bf16-in / f32-accumulate arithmetic as the kernel."""
    h = x.astype(jnp.bfloat16)
    for li, (w, b) in enumerate(params):
        acc = jnp.dot(h.astype(jnp.float32),
                      w.astype(jnp.bfloat16).astype(jnp.float32))
        acc = acc + b
        acc = jnp.where(acc > 0, acc, NEG_SLOPE * acc)
        h = acc if li == len(params) - 1 else acc.astype(jnp.bfloat16)
    return h


if __name__ == "__main__":
    # Small shapes: batch=8, input_dim=16 (x has 32 features), hidden=32, output=16.
    batch, input_dim, hidden_dim, output_dim = 8, 16, 32, 16

    key = jax.random.PRNGKey(0)
    key, kx = jax.random.split(key)
    x = jax.random.normal(kx, (batch, input_dim * 2), jnp.float32)

    params = init_params(key, input_dim, output_dim, hidden_dim, num_layers=4)
    prepared, out_dim = prepare_params(params)            # one-time pad + bf16 cast

    out = mainnet_forward(x, prepared, out_dim)
    out = jax.block_until_ready(out)
    assert out.shape == (batch, output_dim)

    # Tight check against a reference using the kernel's exact bf16/f32 arithmetic.
    ref_q = mainnet_ref_bf16(x, params)
    assert jnp.allclose(out, ref_q, atol=2e-3, rtol=2e-3), "mismatch vs bf16-matched reference"
    # Loose check against the pure-f32 (PyTorch-semantics) reference.
    ref = mainnet_ref_f32(x, params)
    assert jnp.allclose(out, ref, atol=5e-2, rtol=5e-2), "mismatch vs f32 reference"

    print("KERNEL_OK")
</pallas_src>

<mosaic_0001>
module attributes {stable_mosaic.version = 11 : i64} {
  func.func @_mainnet_kernel(%arg0: i32, %arg1: memref<8x32xf32, #tpu.memory_space<vmem>>, %arg2: memref<32x128xbf16, #tpu.memory_space<vmem>>, %arg3: memref<1x128xf32, #tpu.memory_space<vmem>>, %arg4: memref<128x128xbf16, #tpu.memory_space<vmem>>, %arg5: memref<1x128xf32, #tpu.memory_space<vmem>>, %arg6: memref<128x128xbf16, #tpu.memory_space<vmem>>, %arg7: memref<1x128xf32, #tpu.memory_space<vmem>>, %arg8: memref<128x128xbf16, #tpu.memory_space<vmem>>, %arg9: memref<1x128xf32, #tpu.memory_space<vmem>>, %arg10: memref<8x128xf32, #tpu.memory_space<vmem>>) attributes {dimension_semantics = [#tpu.dimension_semantics<parallel>], iteration_bounds = array<i64: 1>, scalar_prefetch = 0 : i64, scratch_operands = 0 : i64, tpu.core_type = #tpu.core_type<tc>, window_params = [{transform_indices = @transform_0, window_bounds = array<i64: 8, 32>}, {pipeline_mode = #tpu.pipeline_mode<synchronous>, transform_indices = @transform_1, window_bounds = array<i64: 32, 128>}, {pipeline_mode = #tpu.pipeline_mode<synchronous>, transform_indices = @transform_2, window_bounds = array<i64: 1, 128>}, {pipeline_mode = #tpu.pipeline_mode<synchronous>, transform_indices = @transform_3, window_bounds = array<i64: 128, 128>}, {pipeline_mode = #tpu.pipeline_mode<synchronous>, transform_indices = @transform_4, window_bounds = array<i64: 1, 128>}, {pipeline_mode = #tpu.pipeline_mode<synchronous>, transform_indices = @transform_5, window_bounds = array<i64: 128, 128>}, {pipeline_mode = #tpu.pipeline_mode<synchronous>, transform_indices = @transform_6, window_bounds = array<i64: 1, 128>}, {pipeline_mode = #tpu.pipeline_mode<synchronous>, transform_indices = @transform_7, window_bounds = array<i64: 128, 128>}, {pipeline_mode = #tpu.pipeline_mode<synchronous>, transform_indices = @transform_8, window_bounds = array<i64: 1, 128>}, {transform_indices = @transform_9, window_bounds = array<i64: 8, 128>}]} {
    %c0 = arith.constant 0 : index
    %c0_0 = arith.constant 0 : index
    %0 = vector.load %arg1[%c0, %c0_0] : memref<8x32xf32, #tpu.memory_space<vmem>>, vector<8x32xf32>
    %1 = arith.truncf %0 : vector<8x32xf32> to vector<8x32xbf16>
    %c0_1 = arith.constant 0 : index
    %c0_2 = arith.constant 0 : index
    %2 = vector.load %arg2[%c0_1, %c0_2] : memref<32x128xbf16, #tpu.memory_space<vmem>>, vector<32x128xbf16>
    %cst = arith.constant dense<0.000000e+00> : vector<8x128xf32>
    %3 = tpu.matmul %1, %2, %cst {dimension_numbers = #tpu.dot_dimension_numbers<[1], [0], [0], [1], [0, 0, 1, 1], [], []>} : vector<8x32xbf16>, vector<32x128xbf16>, vector<8x128xf32> -> vector<8x128xf32>
    %c0_3 = arith.constant 0 : index
    %c0_4 = arith.constant 0 : index
    %4 = vector.load %arg3[%c0_3, %c0_4] : memref<1x128xf32, #tpu.memory_space<vmem>>, vector<1x128xf32>
    %5 = vector.broadcast %4 : vector<1x128xf32> to vector<8x128xf32>
    %6 = arith.addf %3, %5 : vector<8x128xf32>
    %cst_5 = arith.constant 0.000000e+00 : f32
    %7 = vector.broadcast %cst_5 : f32 to vector<8x128xf32>
    %8 = arith.cmpf ogt, %6, %7 : vector<8x128xf32>
    %cst_6 = arith.constant 0.00999999977 : f32
    %9 = vector.broadcast %cst_6 : f32 to vector<8x128xf32>
    %10 = arith.mulf %9, %6 : vector<8x128xf32>
    %11 = arith.select %8, %6, %10 : vector<8x128xi1>, vector<8x128xf32>
    %12 = arith.truncf %11 : vector<8x128xf32> to vector<8x128xbf16>
    %c0_7 = arith.constant 0 : index
    %c0_8 = arith.constant 0 : index
    %13 = vector.load %arg4[%c0_7, %c0_8] : memref<128x128xbf16, #tpu.memory_space<vmem>>, vector<128x128xbf16>
    %cst_9 = arith.constant dense<0.000000e+00> : vector<8x128xf32>
    %14 = tpu.matmul %12, %13, %cst_9 {dimension_numbers = #tpu.dot_dimension_numbers<[1], [0], [0], [1], [0, 0, 1, 1], [], []>} : vector<8x128xbf16>, vector<128x128xbf16>, vector<8x128xf32> -> vector<8x128xf32>
    %c0_10 = arith.constant 0 : index
    %c0_11 = arith.constant 0 : index
    %15 = vector.load %arg5[%c0_10, %c0_11] : memref<1x128xf32, #tpu.memory_space<vmem>>, vector<1x128xf32>
    %16 = vector.broadcast %15 : vector<1x128xf32> to vector<8x128xf32>
    %17 = arith.addf %14, %16 : vector<8x128xf32>
    %cst_12 = arith.constant 0.000000e+00 : f32
    %18 = vector.broadcast %cst_12 : f32 to vector<8x128xf32>
    %19 = arith.cmpf ogt, %17, %18 : vector<8x128xf32>
    %cst_13 = arith.constant 0.00999999977 : f32
    %20 = vector.broadcast %cst_13 : f32 to vector<8x128xf32>
    %21 = arith.mulf %20, %17 : vector<8x128xf32>
    %22 = arith.select %19, %17, %21 : vector<8x128xi1>, vector<8x128xf32>
    %23 = arith.truncf %22 : vector<8x128xf32> to vector<8x128xbf16>
    %c0_14 = arith.constant 0 : index
    %c0_15 = arith.constant 0 : index
    %24 = vector.load %arg6[%c0_14, %c0_15] : memref<128x128xbf16, #tpu.memory_space<vmem>>, vector<128x128xbf16>
    %cst_16 = arith.constant dense<0.000000e+00> : vector<8x128xf32>
    %25 = tpu.matmul %23, %24, %cst_16 {dimension_numbers = #tpu.dot_dimension_numbers<[1], [0], [0], [1], [0, 0, 1, 1], [], []>} : vector<8x128xbf16>, vector<128x128xbf16>, vector<8x128xf32> -> vector<8x128xf32>
    %c0_17 = arith.constant 0 : index
    %c0_18 = arith.constant 0 : index
    %26 = vector.load %arg7[%c0_17, %c0_18] : memref<1x128xf32, #tpu.memory_space<vmem>>, vector<1x128xf32>
    %27 = vector.broadcast %26 : vector<1x128xf32> to vector<8x128xf32>
    %28 = arith.addf %25, %27 : vector<8x128xf32>
    %cst_19 = arith.constant 0.000000e+00 : f32
    %29 = vector.broadcast %cst_19 : f32 to vector<8x128xf32>
    %30 = arith.cmpf ogt, %28, %29 : vector<8x128xf32>
    %cst_20 = arith.constant 0.00999999977 : f32
    %31 = vector.broadcast %cst_20 : f32 to vector<8x128xf32>
    %32 = arith.mulf %31, %28 : vector<8x128xf32>
    %33 = arith.select %30, %28, %32 : vector<8x128xi1>, vector<8x128xf32>
    %34 = arith.truncf %33 : vector<8x128xf32> to vector<8x128xbf16>
    %c0_21 = arith.constant 0 : index
    %c0_22 = arith.constant 0 : index
    %35 = vector.load %arg8[%c0_21, %c0_22] : memref<128x128xbf16, #tpu.memory_space<vmem>>, vector<128x128xbf16>
    %cst_23 = arith.constant dense<0.000000e+00> : vector<8x128xf32>
    %36 = tpu.matmul %34, %35, %cst_23 {dimension_numbers = #tpu.dot_dimension_numbers<[1], [0], [0], [1], [0, 0, 1, 1], [], []>} : vector<8x128xbf16>, vector<128x128xbf16>, vector<8x128xf32> -> vector<8x128xf32>
    %c0_24 = arith.constant 0 : index
    %c0_25 = arith.constant 0 : index
    %37 = vector.load %arg9[%c0_24, %c0_25] : memref<1x128xf32, #tpu.memory_space<vmem>>, vector<1x128xf32>
    %38 = vector.broadcast %37 : vector<1x128xf32> to vector<8x128xf32>
    %39 = arith.addf %36, %38 : vector<8x128xf32>
    %cst_26 = arith.constant 0.000000e+00 : f32
    %40 = vector.broadcast %cst_26 : f32 to vector<8x128xf32>
    %41 = arith.cmpf ogt, %39, %40 : vector<8x128xf32>
    %cst_27 = arith.constant 0.00999999977 : f32
    %42 = vector.broadcast %cst_27 : f32 to vector<8x128xf32>
    %43 = arith.mulf %42, %39 : vector<8x128xf32>
    %44 = arith.select %41, %39, %43 : vector<8x128xi1>, vector<8x128xf32>
    %c0_28 = arith.constant 0 : index
    %c0_29 = arith.constant 0 : index
    %45 = vector.load %arg10[%c0_28, %c0_29] : memref<8x128xf32, #tpu.memory_space<vmem>>, vector<8x128xf32>
    tpu.vector_store %arg10[%c0_28, %c0_29], %44 {strides = array<i32>} : memref<8x128xf32, #tpu.memory_space<vmem>>, vector<8x128xf32>,
    return
  }
  func.func @transform_0(%arg0: i32) -> (i32, i32) {
    %c0_i32 = arith.constant 0 : i32
    %c0_i32_0 = arith.constant 0 : i32
    return %arg0, %c0_i32 : i32, i32
  }
  func.func @transform_1(%arg0: i32) -> (i32, i32) {
    %c0_i32 = arith.constant 0 : i32
    %c0_i32_0 = arith.constant 0 : i32
    %c0_i32_1 = arith.constant 0 : i32
    return %c0_i32, %c0_i32_0 : i32, i32
  }
  func.func @transform_2(%arg0: i32) -> (i32, i32) {
    %c0_i32 = arith.constant 0 : i32
    %c0_i32_0 = arith.constant 0 : i32
    %c0_i32_1 = arith.constant 0 : i32
    return %c0_i32, %c0_i32_0 : i32, i32
  }
  func.func @transform_3(%arg0: i32) -> (i32, i32) {
    %c0_i32 = arith.constant 0 : i32
    %c0_i32_0 = arith.constant 0 : i32
    %c0_i32_1 = arith.constant 0 : i32
    return %c0_i32, %c0_i32_0 : i32, i32
  }
  func.func @transform_4(%arg0: i32) -> (i32, i32) {
    %c0_i32 = arith.constant 0 : i32
    %c0_i32_0 = arith.constant 0 : i32
    %c0_i32_1 = arith.constant 0 : i32
    return %c0_i32, %c0_i32_0 : i32, i32
  }
  func.func @transform_5(%arg0: i32) -> (i32, i32) {
    %c0_i32 = arith.constant 0 : i32
    %c0_i32_0 = arith.constant 0 : i32
    %c0_i32_1 = arith.constant 0 : i32
    return %c0_i32, %c0_i32_0 : i32, i32
  }
  func.func @transform_6(%arg0: i32) -> (i32, i32) {
    %c0_i32 = arith.constant 0 : i32
    %c0_i32_0 = arith.constant 0 : i32
    %c0_i32_1 = arith.constant 0 : i32
    return %c0_i32, %c0_i32_0 : i32, i32
  }
  func.func @transform_7(%arg0: i32) -> (i32, i32) {
    %c0_i32 = arith.constant 0 : i32
    %c0_i32_0 = arith.constant 0 : i32
    %c0_i32_1 = arith.constant 0 : i32
    return %c0_i32, %c0_i32_0 : i32, i32
  }
  func.func @transform_8(%arg0: i32) -> (i32, i32) {
    %c0_i32 = arith.constant 0 : i32
    %c0_i32_0 = arith.constant 0 : i32
    %c0_i32_1 = arith.constant 0 : i32
    return %c0_i32, %c0_i32_0 : i32, i32
  }
  func.func @transform_9(%arg0: i32) -> (i32, i32) {
    %c0_i32 = arith.constant 0 : i32
    %c0_i32_0 = arith.constant 0 : i32
    return %arg0, %c0_i32 : i32, i32
  }
}

</mosaic_0001>

<llo_original>
// kernel: tpu_custom_call.1
$region0: #{tpu_custom_call.1}
  #allocation0 [shape = 'u32[]', space=smem, size = 0x4, offset = 0x4, fixed_abs, tag = 'smem constant byte address 0x4 - core index']
  #allocation1 [shape = 'u32[72,128]{1,0:T(1,128)}', space=vmem, size = 0x9000, scoped, tag = 'internal scratch']
  %s0 = inlined_call_operand.hbm [shape: f32[8,32], index: 0, kind: input, shape index: {}]
  %s1 = inlined_call_operand.hbm [shape: bf16[32,128], index: 1, kind: input, shape index: {}]
  %s2 = inlined_call_operand.vmem [shape: f32[1,128], index: 2, kind: input, shape index: {}]
  %s3 = inlined_call_operand.hbm [shape: bf16[128,128], index: 3, kind: input, shape index: {}]
  %s4 = inlined_call_operand.vmem [shape: f32[1,128], index: 4, kind: input, shape index: {}]
  %s5 = inlined_call_operand.hbm [shape: bf16[128,128], index: 5, kind: input, shape index: {}]
  %s6 = inlined_call_operand.vmem [shape: f32[1,128], index: 6, kind: input, shape index: {}]
  %s7 = inlined_call_operand.hbm [shape: bf16[128,128], index: 7, kind: input, shape index: {}]
  %s8 = inlined_call_operand.vmem [shape: f32[1,128], index: 8, kind: input, shape index: {}]
  %s9 = inlined_call_operand.hbm [shape: f32[8,128], index: 9, kind: output, shape index: {}]
  %s10 = sld [smem:[#allocation0]]
  $region66: #{tpu_custom_call.1} parent=0
    _
  %s12 = ssub.s32 1, %s10
  %s13 = scalar_select 0, %s12, %s10
  $region1: #{tpu_custom_call.1} parent=0
    #allocation2 [shape = 'u8[4096]{0}', space=vmem, size = 0x1000, scoped, tag = 'input window, operand 0, single buffered']
    #allocation3 [shape = 's32[1]{0}', space=sflag, size = 0x4, scoped, tag = 'scoped memory for tpu_custom_call.1']
    #allocation4 [shape = 's32[1]{0}', space=sflag, size = 0x4, scoped, tag = 'scoped memory for tpu_custom_call.1']
    #allocation5 [shape = 'u8[8192]{0}', space=vmem, size = 0x2000, scoped, tag = 'input window, operand 1, single buffered']
    #allocation6 [shape = 's32[1]{0}', space=sflag, size = 0x4, scoped, tag = 'scoped memory for tpu_custom_call.1']
    #allocation7 [shape = 'u8[32768]{0}', space=vmem, size = 0x8000, scoped, tag = 'input window, operand 3, single buffered']
    #allocation8 [shape = 'u8[32768]{0}', space=vmem, size = 0x8000, scoped, tag = 'input window, operand 5, single buffered']
    #allocation9 [shape = 's32[1]{0}', space=sflag, size = 0x4, scoped, tag = 'scoped memory for tpu_custom_call.1']
    #allocation10 [shape = 'u8[32768]{0}', space=vmem, size = 0x8000, scoped, tag = 'input window, operand 7, single buffered']
    #allocation11 [shape = 'u8[4096]{0}', space=vmem, size = 0x1000, scoped, tag = 'output window, operand 0, single buffered']
    %14 = vsyncpa [#allocation3], 0
    %15 = vsyncpa [#allocation6], 0
    %16 = vsyncpa [#allocation9], 0
    %17 = vsyncpa [#allocation4], 0
    // Predicated region
    $region2: #{tpu_custom_call.1} parent=1 // pred_check
      _
    $region3: #{tpu_custom_call.1} parent=1 // pred_check_branch
      %19 = sbr.rel (0) target = $region5
    $region4: #{tpu_custom_call.1} parent=1 // pred_region
      %21 = vsyncadd [#allocation3], 0
      %s23 = sshll.u32 %s0, 4
      %s24 = int_to_ptr.hbm [resolvable:$true] %s23
      %s25 = sshll.u32 [#allocation2], 4
      %s26 = int_to_ptr.vmem [resolvable:$true] %s25
      %28 = dma.hbm_to_vmem [thread:$0]  %s24, 128, %s26, [#allocation3]
    $region5: #{tpu_custom_call.1} parent=1 // pred_fallthru
      _
    // Predicated region
    $region6: #{tpu_custom_call.1} parent=1 // pred_check
      _
    $region7: #{tpu_custom_call.1} parent=1 // pred_check_branch
      %30 = sbr.rel (0) target = $region9
    $region8: #{tpu_custom_call.1} parent=1 // pred_region
      %32 = vsyncadd [#allocation6], 0
      %s33 = sshll.u32 %s1, 4
      %s34 = int_to_ptr.hbm [resolvable:$true] %s33
      %s35 = sshll.u32 [#allocation5], 4
      %s36 = int_to_ptr.vmem [resolvable:$true] %s35
      %41 = dma.hbm_to_vmem [thread:$0]  %s34, 256, %s36, [#allocation6], 64, 64, 4
    $region9: #{tpu_custom_call.1} parent=1 // pred_fallthru
      _
    // Predicated region
    $region10: #{tpu_custom_call.1} parent=1 // pred_check
      _
    $region11: #{tpu_custom_call.1} parent=1 // pred_check_branch
      %43 = sbr.rel (0) target = $region13
    $region12: #{tpu_custom_call.1} parent=1 // pred_region
      _
    $region13: #{tpu_custom_call.1} parent=1 // pred_fallthru
      _
    // Predicated region
    $region14: #{tpu_custom_call.1} parent=1 // pred_check
      _
    $region15: #{tpu_custom_call.1} parent=1 // pred_check_branch
      %45 = sbr.rel (0) target = $region17
    $region16: #{tpu_custom_call.1} parent=1 // pred_region
      %47 = vsyncadd [#allocation6], 0
      %s48 = sshll.u32 %s3, 4
      %s49 = int_to_ptr.hbm [resolvable:$true] %s48
      %s50 = sshll.u32 [#allocation7], 4
      %s51 = int_to_ptr.vmem [resolvable:$true] %s50
      %56 = dma.hbm_to_vmem [thread:$0]  %s49, 1024, %s51, [#allocation6], 64, 64, 4
    $region17: #{tpu_custom_call.1} parent=1 // pred_fallthru
      _
    // Predicated region
    $region18: #{tpu_custom_call.1} parent=1 // pred_check
      _
    $region19: #{tpu_custom_call.1} parent=1 // pred_check_branch
      %58 = sbr.rel (0) target = $region21
    $region20: #{tpu_custom_call.1} parent=1 // pred_region
      _
    $region21: #{tpu_custom_call.1} parent=1 // pred_fallthru
      _
    // Predicated region
    $region22: #{tpu_custom_call.1} parent=1 // pred_check
      _
    $region23: #{tpu_custom_call.1} parent=1 // pred_check_branch
      %60 = sbr.rel (0) target = $region25
    $region24: #{tpu_custom_call.1} parent=1 // pred_region
      %62 = vsyncadd [#allocation9], 0
      %s63 = sshll.u32 %s5, 4
      %s64 = int_to_ptr.hbm [resolvable:$true] %s63
      %s65 = sshll.u32 [#allocation8], 4
      %s66 = int_to_ptr.vmem [resolvable:$true] %s65
      %71 = dma.hbm_to_vmem [thread:$0]  %s64, 1024, %s66, [#allocation9], 64, 64, 4
    $region25: #{tpu_custom_call.1} parent=1 // pred_fallthru
      _
    // Predicated region
    $region26: #{tpu_custom_call.1} parent=1 // pred_check
      _
    $region27: #{tpu_custom_call.1} parent=1 // pred_check_branch
      %73 = sbr.rel (0) target = $region29
    $region28: #{tpu_custom_call.1} parent=1 // pred_region
      _
    $region29: #{tpu_custom_call.1} parent=1 // pred_fallthru
      _
    // Predicated region
    $region30: #{tpu_custom_call.1} parent=1 // pred_check
      _
    $region31: #{tpu_custom_call.1} parent=1 // pred_check_branch
      %75 = sbr.rel (0) target = $region33
    $region32: #{tpu_custom_call.1} parent=1 // pred_region
      %77 = vsyncadd [#allocation9], 0
      %s78 = sshll.u32 %s7, 4
      %s79 = int_to_ptr.hbm [resolvable:$true] %s78
      %s80 = sshll.u32 [#allocation10], 4
      %s81 = int_to_ptr.vmem [resolvable:$true] %s80
      %86 = dma.hbm_to_vmem [thread:$0]  %s79, 1024, %s81, [#allocation9], 64, 64, 4
    $region33: #{tpu_custom_call.1} parent=1 // pred_fallthru
      _
    // Predicated region
    $region34: #{tpu_custom_call.1} parent=1 // pred_check
      _
    $region35: #{tpu_custom_call.1} parent=1 // pred_check_branch
      %88 = sbr.rel (0) target = $region37
    $region36: #{tpu_custom_call.1} parent=1 // pred_region
      _
    $region37: #{tpu_custom_call.1} parent=1 // pred_fallthru
      _
    // Predicated region
    $region38: #{tpu_custom_call.1} parent=1 // pred_check
      _
    $region39: #{tpu_custom_call.1} parent=1 // pred_check_branch
      %90 = sbr.rel (0) target = $region41
    $region40: #{tpu_custom_call.1} parent=1 // pred_region
      %92 = dma.done [#allocation3], 128
    $region41: #{tpu_custom_call.1} parent=1 // pred_fallthru
      _
    // Predicated region
    $region42: #{tpu_custom_call.1} parent=1 // pred_check
      _
    $region43: #{tpu_custom_call.1} parent=1 // pred_check_branch
      %94 = sbr.rel (0) target = $region45
    $region44: #{tpu_custom_call.1} parent=1 // pred_region
      %96 = dma.done [#allocation6], 256
    $region45: #{tpu_custom_call.1} parent=1 // pred_fallthru
      _
    // Predicated region
    $region46: #{tpu_custom_call.1} parent=1 // pred_check
      _
    $region47: #{tpu_custom_call.1} parent=1 // pred_check_branch
      %98 = sbr.rel (0) target = $region49
    $region48: #{tpu_custom_call.1} parent=1 // pred_region
      %100 = dma.done [#allocation6], 1024
    $region49: #{tpu_custom_call.1} parent=1 // pred_fallthru
      _
    // Predicated region
    $region50: #{tpu_custom_call.1} parent=1 // pred_check
      _
    $region51: #{tpu_custom_call.1} parent=1 // pred_check_branch
      %102 = sbr.rel (0) target = $region53
    $region52: #{tpu_custom_call.1} parent=1 // pred_region
      %104 = dma.done [#allocation9], 1024
    $region53: #{tpu_custom_call.1} parent=1 // pred_fallthru
      _
    // Predicated region
    $region54: #{tpu_custom_call.1} parent=1 // pred_check
      _
    $region55: #{tpu_custom_call.1} parent=1 // pred_check_branch
      %106 = sbr.rel (0) target = $region57
    $region56: #{tpu_custom_call.1} parent=1 // pred_region
      %108 = dma.done [#allocation9], 1024
    $region57: #{tpu_custom_call.1} parent=1 // pred_fallthru
      _
    %v110 = vld [vmem:[#allocation2] sm:$0xff]
    %v111 = vpack.c.bf16 %v110, %v110
    %v112 = vld [vmem:[#allocation5] sm:$0xf]
    %v113 = vld [vmem:[#allocation5 + $0x4] sm:$0xf]
    %v114 = vld [vmem:[#allocation5 + $0x8] sm:$0xf]
    %v115 = vld [vmem:[#allocation5 + $0xc] sm:$0xf]
    %v116 = vld [vmem:[%s2] sm:$0x1]
    %v118 = vperm.slane %v116, 0
    %v124 = vunpack.c.l.b16 %v112
    %v125 = vunpack.c.l.b16 %v113
    %v126 = vunpack.c.l.b16 %v114
    %v127 = vunpack.c.l.b16 %v115
    %v128 = vpack.c.b16 %v125, %v124
    %v129 = vpack.c.b16 %v127, %v126
    %vm132 = vcmask 261120
    %v134 = vsel %vm132, %v111, 0
    %136 = vmatpush.bf16.msra.mxu0 0
    %137 = vmatpush.bf16.msra.mxu0 0
    %138 = vmatpush.bf16.msra.mxu0 0
    %139 = vmatpush.bf16.msra.mxu0 0
    %140 = vmatpush.bf16.msra.mxu0 0
    %141 = vmatpush.bf16.msra.mxu0 0
    %142 = vmatpush.bf16.msra.mxu0 %v129
    %143 = vmatpush.bf16.msra.mxu0 %v128
    %144 = vmatmul.bf16.gmra.mxu0 %v134
    %v145 = vpop.f32.mrf.mxu0
    %v146 = vadd.f32 %v118, %v145
    %v147 = vpop.f32.mrf.mxu0
    %148 = vdwg.mxu0
    %vm149 = vcmp.gt.f32.partialorder %v146, 0.0
    %v150 = vmul.f32 %v146, 0.01
    %v151 = vsel %vm149, %v146, %v150
    %v152 = vpack.c.bf16 %v151, %v151
    %v153 = vld [vmem:[#allocation7] sm:$0xf]
    %v154 = vld [vmem:[#allocation7 + $0x4] sm:$0xf]
    %v155 = vld [vmem:[#allocation7 + $0x8] sm:$0xf]
    %v156 = vld [vmem:[#allocation7 + $0xc] sm:$0xf]
    %v157 = vld [vmem:[#allocation7 + $0x10] sm:$0xf]
    %v158 = vld [vmem:[#allocation7 + $0x14] sm:$0xf]
    %v159 = vld [vmem:[#allocation7 + $0x18] sm:$0xf]
    %v160 = vld [vmem:[#allocation7 + $0x1c] sm:$0xf]
    %v161 = vld [vmem:[#allocation7 + $0x20] sm:$0xf]
    %v162 = vld [vmem:[#allocation7 + $0x24] sm:$0xf]
    %v163 = vld [vmem:[#allocation7 + $0x28] sm:$0xf]
    %v164 = vld [vmem:[#allocation7 + $0x2c] sm:$0xf]
    %v165 = vld [vmem:[#allocation7 + $0x30] sm:$0xf]
    %v166 = vld [vmem:[#allocation7 + $0x34] sm:$0xf]
    %v167 = vld [vmem:[#allocation7 + $0x38] sm:$0xf]
    %v168 = vld [vmem:[#allocation7 + $0x3c] sm:$0xf]
    %v169 = vld [vmem:[%s4] sm:$0x1]
    %v171 = vperm.slane %v169, 0
    %v189 = vunpack.c.l.b16 %v153
    %v190 = vunpack.c.l.b16 %v154
    %v191 = vunpack.c.l.b16 %v155
    %v192 = vunpack.c.l.b16 %v156
    %v193 = vunpack.c.l.b16 %v157
    %v194 = vunpack.c.l.b16 %v158
    %v195 = vunpack.c.l.b16 %v159
    %v196 = vunpack.c.l.b16 %v160
    %v197 = vunpack.c.l.b16 %v161
    %v198 = vunpack.c.l.b16 %v162
    %v199 = vunpack.c.l.b16 %v163
    %v200 = vunpack.c.l.b16 %v164
    %v201 = vunpack.c.l.b16 %v165
    %v202 = vunpack.c.l.b16 %v166
    %v203 = vunpack.c.l.b16 %v167
    %v204 = vunpack.c.l.b16 %v168
    %v205 = vpack.c.b16 %v190, %v189
    %v206 = vpack.c.b16 %v192, %v191
    %v207 = vpack.c.b16 %v194, %v193
    %v208 = vpack.c.b16 %v196, %v195
    %v209 = vpack.c.b16 %v198, %v197
    %v210 = vpack.c.b16 %v200, %v199
    %v211 = vpack.c.b16 %v202, %v201
    %v212 = vpack.c.b16 %v204, %v203
    %221 = vmatpush.bf16.msra.mxu0 %v212
    %222 = vmatpush.bf16.msra.mxu0 %v211
    %223 = vmatpush.bf16.msra.mxu0 %v210
    %224 = vmatpush.bf16.msra.mxu0 %v209
    %225 = vmatpush.bf16.msra.mxu0 %v208
    %226 = vmatpush.bf16.msra.mxu0 %v207
    %227 = vmatpush.bf16.msra.mxu0 %v206
    %228 = vmatpush.bf16.msra.mxu0 %v205
    %229 = vmatmul.bf16.gmra.mxu0 %v152
    %v230 = vpop.f32.mrf.mxu0
    %v231 = vadd.f32 %v171, %v230
    %v232 = vpop.f32.mrf.mxu0
    %233 = vdwg.mxu0
    %vm234 = vcmp.gt.f32.partialorder %v231, 0.0
    %v235 = vmul.f32 %v231, 0.01
    %v236 = vsel %vm234, %v231, %v235
    %v237 = vpack.c.bf16 %v236, %v236
    %v238 = vld [vmem:[#allocation8] sm:$0xf]
    %v239 = vld [vmem:[#allocation8 + $0x4] sm:$0xf]
    %v240 = vld [vmem:[#allocation8 + $0x8] sm:$0xf]
    %v241 = vld [vmem:[#allocation8 + $0xc] sm:$0xf]
    %v242 = vld [vmem:[#allocation8 + $0x10] sm:$0xf]
    %v243 = vld [vmem:[#allocation8 + $0x14] sm:$0xf]
    %v244 = vld [vmem:[#allocation8 + $0x18] sm:$0xf]
    %v245 = vld [vmem:[#allocation8 + $0x1c] sm:$0xf]
    %v246 = vld [vmem:[#allocation8 + $0x20] sm:$0xf]
    %v247 = vld [vmem:[#allocation8 + $0x24] sm:$0xf]
    %v248 = vld [vmem:[#allocation8 + $0x28] sm:$0xf]
    %v249 = vld [vmem:[#allocation8 + $0x2c] sm:$0xf]
    %v250 = vld [vmem:[#allocation8 + $0x30] sm:$0xf]
    %v251 = vld [vmem:[#allocation8 + $0x34] sm:$0xf]
    %v252 = vld [vmem:[#allocation8 + $0x38] sm:$0xf]
    %v253 = vld [vmem:[#allocation8 + $0x3c] sm:$0xf]
    %v254 = vld [vmem:[%s6] sm:$0x1]
    %v256 = vperm.slane %v254, 0
    %v274 = vunpack.c.l.b16 %v238
    %v275 = vunpack.c.l.b16 %v239
    %v276 = vunpack.c.l.b16 %v240
    %v277 = vunpack.c.l.b16 %v241
    %v278 = vunpack.c.l.b16 %v242
    %v279 = vunpack.c.l.b16 %v243
    %v280 = vunpack.c.l.b16 %v244
    %v281 = vunpack.c.l.b16 %v245
    %v282 = vunpack.c.l.b16 %v246
    %v283 = vunpack.c.l.b16 %v247
    %v284 = vunpack.c.l.b16 %v248
    %v285 = vunpack.c.l.b16 %v249
    %v286 = vunpack.c.l.b16 %v250
    %v287 = vunpack.c.l.b16 %v251
    %v288 = vunpack.c.l.b16 %v252
    %v289 = vunpack.c.l.b16 %v253
    %v290 = vpack.c.b16 %v275, %v274
    %v291 = vpack.c.b16 %v277, %v276
    %v292 = vpack.c.b16 %v279, %v278
    %v293 = vpack.c.b16 %v281, %v280
    %v294 = vpack.c.b16 %v283, %v282
    %v295 = vpack.c.b16 %v285, %v284
    %v296 = vpack.c.b16 %v287, %v286
    %v297 = vpack.c.b16 %v289, %v288
    %306 = vmatpush.bf16.msra.mxu0 %v297
    %307 = vmatpush.bf16.msra.mxu0 %v296
    %308 = vmatpush.bf16.msra.mxu0 %v295
    %309 = vmatpush.bf16.msra.mxu0 %v294
    %310 = vmatpush.bf16.msra.mxu0 %v293
    %311 = vmatpush.bf16.msra.mxu0 %v292
    %312 = vmatpush.bf16.msra.mxu0 %v291
    %313 = vmatpush.bf16.msra.mxu0 %v290
    %314 = vmatmul.bf16.gmra.mxu0 %v237
    %v315 = vpop.f32.mrf.mxu0
    %v316 = vadd.f32 %v256, %v315
    %v317 = vpop.f32.mrf.mxu0
    %318 = vdwg.mxu0
    %vm319 = vcmp.gt.f32.partialorder %v316, 0.0
    %v320 = vmul.f32 %v316, 0.01
    %v321 = vsel %vm319, %v316, %v320
    %v322 = vpack.c.bf16 %v321, %v321
    %v323 = vld [vmem:[#allocation10] sm:$0xf]
    %v324 = vld [vmem:[#allocation10 + $0x4] sm:$0xf]
    %v325 = vld [vmem:[#allocation10 + $0x8] sm:$0xf]
    %v326 = vld [vmem:[#allocation10 + $0xc] sm:$0xf]
    %v327 = vld [vmem:[#allocation10 + $0x10] sm:$0xf]
    %v328 = vld [vmem:[#allocation10 + $0x14] sm:$0xf]
    %v329 = vld [vmem:[#allocation10 + $0x18] sm:$0xf]
    %v330 = vld [vmem:[#allocation10 + $0x1c] sm:$0xf]
    %v331 = vld [vmem:[#allocation10 + $0x20] sm:$0xf]
    %v332 = vld [vmem:[#allocation10 + $0x24] sm:$0xf]
    %v333 = vld [vmem:[#allocation10 + $0x28] sm:$0xf]
    %v334 = vld [vmem:[#allocation10 + $0x2c] sm:$0xf]
    %v335 = vld [vmem:[#allocation10 + $0x30] sm:$0xf]
    %v336 = vld [vmem:[#allocation10 + $0x34] sm:$0xf]
    %v337 = vld [vmem:[#allocation10 + $0x38] sm:$0xf]
    %v338 = vld [vmem:[#allocation10 + $0x3c] sm:$0xf]
    %v339 = vld [vmem:[%s8] sm:$0x1]
    %v341 = vperm.slane %v339, 0
    %v359 = vunpack.c.l.b16 %v323
    %v360 = vunpack.c.l.b16 %v324
    %v361 = vunpack.c.l.b16 %v325
    %v362 = vunpack.c.l.b16 %v326
    %v363 = vunpack.c.l.b16 %v327
    %v364 = vunpack.c.l.b16 %v328
    %v365 = vunpack.c.l.b16 %v329
    %v366 = vunpack.c.l.b16 %v330
    %v367 = vunpack.c.l.b16 %v331
    %v368 = vunpack.c.l.b16 %v332
    %v369 = vunpack.c.l.b16 %v333
    %v370 = vunpack.c.l.b16 %v334
    %v371 = vunpack.c.l.b16 %v335
    %v372 = vunpack.c.l.b16 %v336
    %v373 = vunpack.c.l.b16 %v337
    %v374 = vunpack.c.l.b16 %v338
    %v375 = vpack.c.b16 %v360, %v359
    %v376 = vpack.c.b16 %v362, %v361
    %v377 = vpack.c.b16 %v364, %v363
    %v378 = vpack.c.b16 %v366, %v365
    %v379 = vpack.c.b16 %v368, %v367
    %v380 = vpack.c.b16 %v370, %v369
    %v381 = vpack.c.b16 %v372, %v371
    %v382 = vpack.c.b16 %v374, %v373
    %391 = vmatpush.bf16.msra.mxu0 %v382
    %392 = vmatpush.bf16.msra.mxu0 %v381
    %393 = vmatpush.bf16.msra.mxu0 %v380
    %394 = vmatpush.bf16.msra.mxu0 %v379
    %395 = vmatpush.bf16.msra.mxu0 %v378
    %396 = vmatpush.bf16.msra.mxu0 %v377
    %397 = vmatpush.bf16.msra.mxu0 %v376
    %398 = vmatpush.bf16.msra.mxu0 %v375
    %399 = vmatmul.bf16.gmra.mxu0 %v322
    %v400 = vpop.f32.mrf.mxu0
    %v401 = vadd.f32 %v341, %v400
    %v402 = vpop.f32.mrf.mxu0
    %403 = vdwg.mxu0
    %vm404 = vcmp.gt.f32.partialorder %v401, 0.0
    %v405 = vmul.f32 %v401, 0.01
    %v406 = vsel %vm404, %v401, %v405
    %407 = vst [vmem:[#allocation11] sm:$0xff] %v406
    // Predicated region
    $region58: #{tpu_custom_call.1} parent=1 // pred_check
      _
    $region59: #{tpu_custom_call.1} parent=1 // pred_check_branch
      %409 = sbr.rel (0) target = $region61
    $region60: #{tpu_custom_call.1} parent=1 // pred_region
      %411 = vsyncadd [#allocation4], 0
      %s413 = sshll.u32 [#allocation11], 4
      %s414 = int_to_ptr.vmem [resolvable:$true] %s413
      %s415 = sshll.u32 %s9, 4
      %s416 = int_to_ptr.hbm [resolvable:$true] %s415
      %418 = dma.vmem_to_hbm [thread:$0]  %s414, 128, %s416, [#allocation4]
    $region61: #{tpu_custom_call.1} parent=1 // pred_fallthru
      _
    // Predicated region
    $region62: #{tpu_custom_call.1} parent=1 // pred_check
      _
    $region63: #{tpu_custom_call.1} parent=1 // pred_check_branch
      %420 = sbr.rel (0) target = $region65
    $region64: #{tpu_custom_call.1} parent=1 // pred_region
      %422 = dma.done [#allocation4], 128
    $region65: #{tpu_custom_call.1} parent=1 // pred_fallthru
      _
    %423 = vsyncpa [#allocation3], 1
    %424 = vsyncpa [#allocation6], 1
    %425 = vsyncpa [#allocation9], 1
    %426 = vsyncpa [#allocation4], 1

</llo_original>
